<compile_context>
chip_gen: v5e
topology: v5e:2x2
jax: 0.10.0
libtpu: 0.0.40
codegen_flags: <defaults>
</compile_context>

<pallas_src>
import functools

import jax
import jax.numpy as jnp
from jax import lax
from jax.experimental import pallas as pl
from jax.experimental.pallas import tpu as pltpu


def _rq_kernel(alpha, inv_two_alpha, a_ref, b_ref, o_ref):
    # a_ref: (TM, D+2) augmented rows  [-2*x_i, 1, ||x_i||^2]
    # b_ref: (TN, D+2) augmented cols  [ x_j, ||x_j||^2, 1]
    # Single MXU matmul yields the squared distances directly.
    d2 = lax.dot_general(
        a_ref[...], b_ref[...],
        dimension_numbers=(((1,), (1,)), ((), ())),   # contract last dim of both
        preferred_element_type=jnp.float32,
    )                                                  # (TM, TN)
    d2 = jnp.maximum(d2, 0.0)                          # clamp like cdist()**2 >= 0

    # d2 / (2*alpha); skip the multiply entirely when the scale is exactly 1.0.
    scaled = d2 if inv_two_alpha == 1.0 else d2 * inv_two_alpha
    base = 1.0 + scaled                                # base >= 1

    # Epilogue specialized on alpha (Python-level branch; alpha is baked in).
    if alpha == 0.5:
        k = lax.rsqrt(base)                            # (base)^(-1/2): one EUP push
    elif alpha == 1.0:
        k = pl.reciprocal(base, approx=True)           # one EUP push, no VALU refine
    elif alpha == 2.0:
        r = pl.reciprocal(base, approx=True)
        k = r * r
    else:
        # General fractional alpha: exp(-alpha * log1p(d2 / (2*alpha))).
        k = jnp.exp(-alpha * jnp.log1p(scaled))

    o_ref[...] = k.astype(o_ref.dtype)


def _round_up(x, m):
    return ((x + m - 1) // m) * m


def rational_quadratic(x, *, alpha=0.5, tm=256, tn=512, out_dtype=jnp.float32):
    """Pallas TPU implementation of RationalQuadratic.forward.

    Args:
      x: (N, D) float array of samples.
      alpha: shape parameter (Python float, baked into the kernel).
      tm, tn: requested output tile sizes (clamped / aligned internally).
      out_dtype: output dtype (float32 matches the PyTorch module; bf16 is a
        store-bandwidth optimization if downstream MMD math tolerates it).

    Returns:
      (N, N) kernel matrix.
    """
    n, d = x.shape
    alpha = float(alpha)
    inv_two_alpha = 1.0 / (2.0 * alpha)

    # Alignment-safe tile selection: tm multiple of 8, tn multiple of 128, never
    # larger than the padded extent they tile.
    tm = _round_up(max(8, min(tm, _round_up(n, 8))), 8)
    tn = _round_up(max(128, min(tn, _round_up(n, 128))), 128)
    n_rows = _round_up(n, tm)
    n_cols = _round_up(n, tn)

    # Build augmented operands once in the wrapper (O(N*D), f32).
    xf = x.astype(jnp.float32)
    r = jnp.sum(xf * xf, axis=1, keepdims=True)        # (N, 1) squared row norms
    ones = jnp.ones_like(r)
    a = jnp.concatenate([-2.0 * xf, ones, r], axis=1)  # (N, D+2) row operand
    b = jnp.concatenate([xf, r, ones], axis=1)         # (N, D+2) col operand
    da = d + 2

    # Zero-pad the sample axis up to the tile grid (padded rows give d2 >= 0,
    # finite kernel values, and are sliced away below).
    a = jnp.pad(a, ((0, n_rows - n), (0, 0)))
    b = jnp.pad(b, ((0, n_cols - n), (0, 0)))

    kernel = functools.partial(_rq_kernel, alpha, inv_two_alpha)

    out = pl.pallas_call(
        kernel,
        out_shape=jax.ShapeDtypeStruct((n_rows, n_cols), out_dtype),
        grid_spec=pltpu.PrefetchScalarGridSpec(
            num_scalar_prefetch=0,
            # j innermost: the row block (and its DMA) stays resident across the
            # inner column loop.
            grid=(n_rows // tm, n_cols // tn),
            in_specs=[
                pl.BlockSpec((tm, da), lambda i, j: (i, 0)),  # augmented row block
                pl.BlockSpec((tn, da), lambda i, j: (j, 0)),  # augmented col block
            ],
            out_specs=pl.BlockSpec((tm, tn), lambda i, j: (i, j)),
        ),
        compiler_params=pltpu.CompilerParams(
            dimension_semantics=("parallel", "parallel"),
        ),
    )(a, b)

    return out[:n, :n]


if __name__ == "__main__":
    key = jax.random.PRNGKey(0)
    N, D = 100, 32  # (n_samples, n_features); N deliberately not (8,128)-aligned
    X = jax.random.normal(key, (N, D), dtype=jnp.float32)

    K = jax.block_until_ready(rational_quadratic(X, alpha=0.5))

    # Reference (plain JAX, exact pairwise differences) of the forward semantics.
    diff = X[:, None, :] - X[None, :, :]
    d2_ref = jnp.sum(diff * diff, axis=-1)
    K_ref = jnp.power(1.0 + d2_ref / (2.0 * 0.5), -0.5)

    assert K.shape == (N, N)
    assert jnp.allclose(K, K_ref, atol=1e-4, rtol=1e-4), float(
        jnp.max(jnp.abs(K - K_ref))
    )
    print("KERNEL_OK")
</pallas_src>

<mosaic_0001>
module attributes {stable_mosaic.version = 11 : i64} {
  func.func @_rq_kernel(%arg0: i32, %arg1: i32, %arg2: memref<104x34xf32, #tpu.memory_space<vmem>>, %arg3: memref<128x34xf32, #tpu.memory_space<vmem>>, %arg4: memref<104x128xf32, #tpu.memory_space<vmem>>) attributes {dimension_semantics = [#tpu.dimension_semantics<parallel>, #tpu.dimension_semantics<parallel>], iteration_bounds = array<i64: 1, 1>, scalar_prefetch = 0 : i64, scratch_operands = 0 : i64, tpu.core_type = #tpu.core_type<tc>, window_params = [{transform_indices = @transform_0, window_bounds = array<i64: 104, 34>}, {transform_indices = @transform_1, window_bounds = array<i64: 128, 34>}, {transform_indices = @transform_2, window_bounds = array<i64: 104, 128>}]} {
    %c0 = arith.constant 0 : index
    %c0_0 = arith.constant 0 : index
    %0 = vector.load %arg2[%c0, %c0_0] : memref<104x34xf32, #tpu.memory_space<vmem>>, vector<104x34xf32>
    %c0_1 = arith.constant 0 : index
    %c0_2 = arith.constant 0 : index
    %1 = vector.load %arg3[%c0_1, %c0_2] : memref<128x34xf32, #tpu.memory_space<vmem>>, vector<128x34xf32>
    %cst = arith.constant dense<0.000000e+00> : vector<104x128xf32>
    %2 = tpu.matmul %0, %1, %cst {dimension_numbers = #tpu.dot_dimension_numbers<[1], [1], [0], [0], [0, 0, 1, 0], [], []>} : vector<104x34xf32>, vector<128x34xf32>, vector<104x128xf32> -> vector<104x128xf32>
    %cst_3 = arith.constant 0.000000e+00 : f32
    %3 = vector.broadcast %cst_3 : f32 to vector<104x128xf32>
    %4 = arith.maximumf %2, %3 : vector<104x128xf32>
    %cst_4 = arith.constant 1.000000e+00 : f32
    %5 = vector.broadcast %cst_4 : f32 to vector<104x128xf32>
    %6 = arith.addf %5, %4 : vector<104x128xf32>
    %7 = math.rsqrt %6 : vector<104x128xf32>
    %c0_5 = arith.constant 0 : index
    %c0_6 = arith.constant 0 : index
    %8 = vector.load %arg4[%c0_5, %c0_6] : memref<104x128xf32, #tpu.memory_space<vmem>>, vector<104x128xf32>
    tpu.vector_store %arg4[%c0_5, %c0_6], %7 {strides = array<i32>} : memref<104x128xf32, #tpu.memory_space<vmem>>, vector<104x128xf32>,
    return
  }
  func.func @transform_0(%arg0: i32, %arg1: i32) -> (i32, i32) {
    %c0_i32 = arith.constant 0 : i32
    %c0_i32_0 = arith.constant 0 : i32
    return %arg0, %c0_i32 : i32, i32
  }
  func.func @transform_1(%arg0: i32, %arg1: i32) -> (i32, i32) {
    %c0_i32 = arith.constant 0 : i32
    %c0_i32_0 = arith.constant 0 : i32
    return %arg1, %c0_i32 : i32, i32
  }
  func.func @transform_2(%arg0: i32, %arg1: i32) -> (i32, i32) {
    %c0_i32 = arith.constant 0 : i32
    return %arg0, %arg1 : i32, i32
  }
}

</mosaic_0001>

<llo_original>
// kernel: tpu_custom_call.1
$region0: #{tpu_custom_call.1}
  #allocation0 [shape = 'u32[]', space=smem, size = 0x4, offset = 0x4, fixed_abs, tag = 'smem constant byte address 0x4 - core index']
  #allocation1 [shape = 'u32[72,128]{1,0:T(1,128)}', space=vmem, size = 0x9000, scoped, tag = 'internal scratch']
  %s0 = inlined_call_operand.vmem [shape: f32[104,34], index: 0, kind: input, shape index: {}]
  %s1 = inlined_call_operand.vmem [shape: f32[128,34], index: 1, kind: input, shape index: {}]
  %s2 = inlined_call_operand.hbm [shape: f32[104,128], index: 2, kind: output, shape index: {}]
  %s3 = sld [smem:[#allocation0]]
  $region18: #{tpu_custom_call.1} parent=0
    _
  %s5 = ssub.s32 1, %s3
  %s6 = scalar_select 0, %s5, %s3
  $region1: #{tpu_custom_call.1} parent=0
    #allocation2 [shape = 'u8[53248]{0}', space=vmem, size = 0xd000, scoped, tag = 'output window, operand 0, single buffered']
    #allocation3 [shape = 's32[1]{0}', space=sflag, size = 0x4, scoped, tag = 'scoped memory for tpu_custom_call.1']
    %7 = vsyncpa [#allocation3], 0
    // Predicated region
    $region2: #{tpu_custom_call.1} parent=1 // pred_check
      _
    $region3: #{tpu_custom_call.1} parent=1 // pred_check_branch
      %9 = sbr.rel (0) target = $region5
    $region4: #{tpu_custom_call.1} parent=1 // pred_region
      _
    $region5: #{tpu_custom_call.1} parent=1 // pred_fallthru
      _
    // Predicated region
    $region6: #{tpu_custom_call.1} parent=1 // pred_check
      _
    $region7: #{tpu_custom_call.1} parent=1 // pred_check_branch
      %11 = sbr.rel (0) target = $region9
    $region8: #{tpu_custom_call.1} parent=1 // pred_region
      _
    $region9: #{tpu_custom_call.1} parent=1 // pred_fallthru
      _
    %v12 = vld [vmem:[%s0] sm:$0xff]
    %v13 = vld [vmem:[%s0 + $0x8] sm:$0xff]
    %v14 = vld [vmem:[%s0 + $0x10] sm:$0xff]
    %v15 = vld [vmem:[%s0 + $0x18] sm:$0xff]
    %v16 = vld [vmem:[%s0 + $0x20] sm:$0xff]
    %v17 = vld [vmem:[%s0 + $0x28] sm:$0xff]
    %v18 = vld [vmem:[%s0 + $0x30] sm:$0xff]
    %v19 = vld [vmem:[%s0 + $0x38] sm:$0xff]
    %v20 = vld [vmem:[%s0 + $0x40] sm:$0xff]
    %v21 = vld [vmem:[%s0 + $0x48] sm:$0xff]
    %v22 = vld [vmem:[%s0 + $0x50] sm:$0xff]
    %v23 = vld [vmem:[%s0 + $0x58] sm:$0xff]
    %v24 = vld [vmem:[%s0 + $0x60] sm:$0xff]
    %v25 = vld [vmem:[%s1] sm:$0xff]
    %v26 = vld [vmem:[%s1 + $0x8] sm:$0xff]
    %v27 = vld [vmem:[%s1 + $0x10] sm:$0xff]
    %v28 = vld [vmem:[%s1 + $0x18] sm:$0xff]
    %v29 = vld [vmem:[%s1 + $0x20] sm:$0xff]
    %v30 = vld [vmem:[%s1 + $0x28] sm:$0xff]
    %v31 = vld [vmem:[%s1 + $0x30] sm:$0xff]
    %v32 = vld [vmem:[%s1 + $0x38] sm:$0xff]
    %v33 = vld [vmem:[%s1 + $0x40] sm:$0xff]
    %v34 = vld [vmem:[%s1 + $0x48] sm:$0xff]
    %v35 = vld [vmem:[%s1 + $0x50] sm:$0xff]
    %v36 = vld [vmem:[%s1 + $0x58] sm:$0xff]
    %v37 = vld [vmem:[%s1 + $0x60] sm:$0xff]
    %v38 = vld [vmem:[%s1 + $0x68] sm:$0xff]
    %v39 = vld [vmem:[%s1 + $0x70] sm:$0xff]
    %v40 = vld [vmem:[%s1 + $0x78] sm:$0xff]
    %vm41 = vcmask 277504
    %v43 = vsel %vm41, %v12, 0
    %v46 = vsel %vm41, %v13, 0
    %v49 = vsel %vm41, %v14, 0
    %v52 = vsel %vm41, %v15, 0
    %v55 = vsel %vm41, %v16, 0
    %v58 = vsel %vm41, %v17, 0
    %v61 = vsel %vm41, %v18, 0
    %v64 = vsel %vm41, %v19, 0
    %v67 = vsel %vm41, %v20, 0
    %v70 = vsel %vm41, %v21, 0
    %v73 = vsel %vm41, %v22, 0
    %v76 = vsel %vm41, %v23, 0
    %v79 = vsel %vm41, %v24, 0
    %v82 = vsel %vm41, %v25, 0
    %v85 = vsel %vm41, %v26, 0
    %v88 = vsel %vm41, %v27, 0
    %v91 = vsel %vm41, %v28, 0
    %v94 = vsel %vm41, %v29, 0
    %v97 = vsel %vm41, %v30, 0
    %v100 = vsel %vm41, %v31, 0
    %v103 = vsel %vm41, %v32, 0
    %v106 = vsel %vm41, %v33, 0
    %v109 = vsel %vm41, %v34, 0
    %v112 = vsel %vm41, %v35, 0
    %v115 = vsel %vm41, %v36, 0
    %v118 = vsel %vm41, %v37, 0
    %v121 = vsel %vm41, %v38, 0
    %v124 = vsel %vm41, %v39, 0
    %v127 = vsel %vm41, %v40, 0
    %129 = vmatpush.xpose.msra.mxu0 %v127
    %130 = vmatpush.xpose.msra.mxu0 %v124
    %131 = vmatpush.xpose.msra.mxu0 %v121
    %132 = vmatpush.xpose.msra.mxu0 %v118
    %133 = vmatpush.xpose.msra.mxu0 %v115
    %134 = vmatpush.xpose.msra.mxu0 %v112
    %135 = vmatpush.xpose.msra.mxu0 %v109
    %136 = vmatpush.xpose.msra.mxu0 %v106
    %137 = vmatpush.xpose.msra.mxu0 %v103
    %138 = vmatpush.xpose.msra.mxu0 %v100
    %139 = vmatpush.xpose.msra.mxu0 %v97
    %140 = vmatpush.xpose.msra.mxu0 %v94
    %141 = vmatpush.xpose.msra.mxu0 %v91
    %142 = vmatpush.xpose.msra.mxu0 %v88
    %143 = vmatpush.xpose.msra.mxu0 %v85
    %144 = vmatpush.xpose.msra.mxu0 %v82
    %145 = vmatmul.f32.gmra.mxu0 %v43
    %v146 = vpop.f32.mrf.mxu0
    %v147 = vadd.f32 0.0, %v146
    %148 = vmatmul.f32.gmra.mxu0 %v46
    %v149 = vpop.f32.mrf.mxu0
    %v150 = vadd.f32 0.0, %v149
    %151 = vmatmul.f32.gmra.mxu0 %v49
    %v152 = vpop.f32.mrf.mxu0
    %v153 = vadd.f32 0.0, %v152
    %154 = vmatmul.f32.gmra.mxu0 %v52
    %v155 = vpop.f32.mrf.mxu0
    %v156 = vadd.f32 0.0, %v155
    %157 = vmatmul.f32.gmra.mxu0 %v55
    %v158 = vpop.f32.mrf.mxu0
    %v159 = vadd.f32 0.0, %v158
    %160 = vmatmul.f32.gmra.mxu0 %v58
    %v161 = vpop.f32.mrf.mxu0
    %v162 = vadd.f32 0.0, %v161
    %163 = vmatmul.f32.gmra.mxu0 %v61
    %v164 = vpop.f32.mrf.mxu0
    %v165 = vadd.f32 0.0, %v164
    %166 = vmatmul.f32.gmra.mxu0 %v64
    %v167 = vpop.f32.mrf.mxu0
    %v168 = vadd.f32 0.0, %v167
    %169 = vmatmul.f32.gmra.mxu0 %v67
    %v170 = vpop.f32.mrf.mxu0
    %v171 = vadd.f32 0.0, %v170
    %172 = vmatmul.f32.gmra.mxu0 %v70
    %v173 = vpop.f32.mrf.mxu0
    %v174 = vadd.f32 0.0, %v173
    %175 = vmatmul.f32.gmra.mxu0 %v73
    %v176 = vpop.f32.mrf.mxu0
    %v177 = vadd.f32 0.0, %v176
    %178 = vmatmul.f32.gmra.mxu0 %v76
    %v179 = vpop.f32.mrf.mxu0
    %v180 = vadd.f32 0.0, %v179
    %181 = vmatmul.f32.gmra.mxu0 %v79
    %v182 = vpop.f32.mrf.mxu0
    %v183 = vadd.f32 0.0, %v182
    %184 = vdwg.mxu0
    %v185 = vmax.f32 %v147, 0.0
    %v186 = vmax.f32 %v150, 0.0
    %v187 = vmax.f32 %v153, 0.0
    %v188 = vmax.f32 %v156, 0.0
    %v189 = vmax.f32 %v159, 0.0
    %v190 = vmax.f32 %v162, 0.0
    %v191 = vmax.f32 %v165, 0.0
    %v192 = vmax.f32 %v168, 0.0
    %v193 = vmax.f32 %v171, 0.0
    %v194 = vmax.f32 %v174, 0.0
    %v195 = vmax.f32 %v177, 0.0
    %v196 = vmax.f32 %v180, 0.0
    %v197 = vmax.f32 %v183, 0.0
    %v198 = vadd.f32 %v185, 1.0
    %v199 = vadd.f32 %v186, 1.0
    %v200 = vadd.f32 %v187, 1.0
    %v201 = vadd.f32 %v188, 1.0
    %v202 = vadd.f32 %v189, 1.0
    %v203 = vadd.f32 %v190, 1.0
    %v204 = vadd.f32 %v191, 1.0
    %v205 = vadd.f32 %v192, 1.0
    %v206 = vadd.f32 %v193, 1.0
    %v207 = vadd.f32 %v194, 1.0
    %v208 = vadd.f32 %v195, 1.0
    %v209 = vadd.f32 %v196, 1.0
    %v210 = vadd.f32 %v197, 1.0
    %v211 = vrsqrt.pop %v198
    %v212 = vmul.f32 %v211, %v198
    %v213 = vmul.f32 %v212, %v211
    %v214 = vmul.f32 0.5, %v213
    %v215 = vsub.f32 1.5, %v214
    %v216 = vmul.f32 %v211, %v215
    %vm217 = vweird.f32 %v198
    %vm218 = vweird.f32 %v211
    %vm219 = vmor %vm217, %vm218
    %v220 = vsel %vm219, %v211, %v216
    %v221 = vrsqrt.pop %v199
    %v222 = vmul.f32 %v221, %v199
    %v223 = vmul.f32 %v222, %v221
    %v224 = vmul.f32 0.5, %v223
    %v225 = vsub.f32 1.5, %v224
    %v226 = vmul.f32 %v221, %v225
    %vm227 = vweird.f32 %v199
    %vm228 = vweird.f32 %v221
    %vm229 = vmor %vm227, %vm228
    %v230 = vsel %vm229, %v221, %v226
    %v231 = vrsqrt.pop %v200
    %v232 = vmul.f32 %v231, %v200
    %v233 = vmul.f32 %v232, %v231
    %v234 = vmul.f32 0.5, %v233
    %v235 = vsub.f32 1.5, %v234
    %v236 = vmul.f32 %v231, %v235
    %vm237 = vweird.f32 %v200
    %vm238 = vweird.f32 %v231
    %vm239 = vmor %vm237, %vm238
    %v240 = vsel %vm239, %v231, %v236
    %v241 = vrsqrt.pop %v201
    %v242 = vmul.f32 %v241, %v201
    %v243 = vmul.f32 %v242, %v241
    %v244 = vmul.f32 0.5, %v243
    %v245 = vsub.f32 1.5, %v244
    %v246 = vmul.f32 %v241, %v245
    %vm247 = vweird.f32 %v201
    %vm248 = vweird.f32 %v241
    %vm249 = vmor %vm247, %vm248
    %v250 = vsel %vm249, %v241, %v246
    %v251 = vrsqrt.pop %v202
    %v252 = vmul.f32 %v251, %v202
    %v253 = vmul.f32 %v252, %v251
    %v254 = vmul.f32 0.5, %v253
    %v255 = vsub.f32 1.5, %v254
    %v256 = vmul.f32 %v251, %v255
    %vm257 = vweird.f32 %v202
    %vm258 = vweird.f32 %v251
    %vm259 = vmor %vm257, %vm258
    %v260 = vsel %vm259, %v251, %v256
    %v261 = vrsqrt.pop %v203
    %v262 = vmul.f32 %v261, %v203
    %v263 = vmul.f32 %v262, %v261
    %v264 = vmul.f32 0.5, %v263
    %v265 = vsub.f32 1.5, %v264
    %v266 = vmul.f32 %v261, %v265
    %vm267 = vweird.f32 %v203
    %vm268 = vweird.f32 %v261
    %vm269 = vmor %vm267, %vm268
    %v270 = vsel %vm269, %v261, %v266
    %v271 = vrsqrt.pop %v204
    %v272 = vmul.f32 %v271, %v204
    %v273 = vmul.f32 %v272, %v271
    %v274 = vmul.f32 0.5, %v273
    %v275 = vsub.f32 1.5, %v274
    %v276 = vmul.f32 %v271, %v275
    %vm277 = vweird.f32 %v204
    %vm278 = vweird.f32 %v271
    %vm279 = vmor %vm277, %vm278
    %v280 = vsel %vm279, %v271, %v276
    %v281 = vrsqrt.pop %v205
    %v282 = vmul.f32 %v281, %v205
    %v283 = vmul.f32 %v282, %v281
    %v284 = vmul.f32 0.5, %v283
    %v285 = vsub.f32 1.5, %v284
    %v286 = vmul.f32 %v281, %v285
    %vm287 = vweird.f32 %v205
    %vm288 = vweird.f32 %v281
    %vm289 = vmor %vm287, %vm288
    %v290 = vsel %vm289, %v281, %v286
    %v291 = vrsqrt.pop %v206
    %v292 = vmul.f32 %v291, %v206
    %v293 = vmul.f32 %v292, %v291
    %v294 = vmul.f32 0.5, %v293
    %v295 = vsub.f32 1.5, %v294
    %v296 = vmul.f32 %v291, %v295
    %vm297 = vweird.f32 %v206
    %vm298 = vweird.f32 %v291
    %vm299 = vmor %vm297, %vm298
    %v300 = vsel %vm299, %v291, %v296
    %v301 = vrsqrt.pop %v207
    %v302 = vmul.f32 %v301, %v207
    %v303 = vmul.f32 %v302, %v301
    %v304 = vmul.f32 0.5, %v303
    %v305 = vsub.f32 1.5, %v304
    %v306 = vmul.f32 %v301, %v305
    %vm307 = vweird.f32 %v207
    %vm308 = vweird.f32 %v301
    %vm309 = vmor %vm307, %vm308
    %v310 = vsel %vm309, %v301, %v306
    %v311 = vrsqrt.pop %v208
    %v312 = vmul.f32 %v311, %v208
    %v313 = vmul.f32 %v312, %v311
    %v314 = vmul.f32 0.5, %v313
    %v315 = vsub.f32 1.5, %v314
    %v316 = vmul.f32 %v311, %v315
    %vm317 = vweird.f32 %v208
    %vm318 = vweird.f32 %v311
    %vm319 = vmor %vm317, %vm318
    %v320 = vsel %vm319, %v311, %v316
    %v321 = vrsqrt.pop %v209
    %v322 = vmul.f32 %v321, %v209
    %v323 = vmul.f32 %v322, %v321
    %v324 = vmul.f32 0.5, %v323
    %v325 = vsub.f32 1.5, %v324
    %v326 = vmul.f32 %v321, %v325
    %vm327 = vweird.f32 %v209
    %vm328 = vweird.f32 %v321
    %vm329 = vmor %vm327, %vm328
    %v330 = vsel %vm329, %v321, %v326
    %v331 = vrsqrt.pop %v210
    %v332 = vmul.f32 %v331, %v210
    %v333 = vmul.f32 %v332, %v331
    %v334 = vmul.f32 0.5, %v333
    %v335 = vsub.f32 1.5, %v334
    %v336 = vmul.f32 %v331, %v335
    %vm337 = vweird.f32 %v210
    %vm338 = vweird.f32 %v331
    %vm339 = vmor %vm337, %vm338
    %v340 = vsel %vm339, %v331, %v336
    %341 = vst [vmem:[#allocation2] sm:$0xff] %v220
    %342 = vst [vmem:[#allocation2 + $0x8] sm:$0xff] %v230
    %343 = vst [vmem:[#allocation2 + $0x10] sm:$0xff] %v240
    %344 = vst [vmem:[#allocation2 + $0x18] sm:$0xff] %v250
    %345 = vst [vmem:[#allocation2 + $0x20] sm:$0xff] %v260
    %346 = vst [vmem:[#allocation2 + $0x28] sm:$0xff] %v270
    %347 = vst [vmem:[#allocation2 + $0x30] sm:$0xff] %v280
    %348 = vst [vmem:[#allocation2 + $0x38] sm:$0xff] %v290
    %349 = vst [vmem:[#allocation2 + $0x40] sm:$0xff] %v300
    %350 = vst [vmem:[#allocation2 + $0x48] sm:$0xff] %v310
    %351 = vst [vmem:[#allocation2 + $0x50] sm:$0xff] %v320
    %352 = vst [vmem:[#allocation2 + $0x58] sm:$0xff] %v330
    %353 = vst [vmem:[#allocation2 + $0x60] sm:$0xff] %v340
    // Predicated region
    $region10: #{tpu_custom_call.1} parent=1 // pred_check
      _
    $region11: #{tpu_custom_call.1} parent=1 // pred_check_branch
      %355 = sbr.rel (0) target = $region13
    $region12: #{tpu_custom_call.1} parent=1 // pred_region
      %357 = vsyncadd [#allocation3], 0
      %s358 = sshll.u32 [#allocation2], 4
      %s359 = int_to_ptr.vmem [resolvable:$true] %s358
      %s360 = sshll.u32 %s2, 4
      %s361 = int_to_ptr.hbm [resolvable:$true] %s360
      %366 = dma.vmem_to_hbm [thread:$0]  %s359, 1664, %s361, [#allocation3], 128, 128, 8
    $region13: #{tpu_custom_call.1} parent=1 // pred_fallthru
      _
    // Predicated region
    $region14: #{tpu_custom_call.1} parent=1 // pred_check
      _
    $region15: #{tpu_custom_call.1} parent=1 // pred_check_branch
      %368 = sbr.rel (0) target = $region17
    $region16: #{tpu_custom_call.1} parent=1 // pred_region
      %370 = dma.done [#allocation3], 1664
    $region17: #{tpu_custom_call.1} parent=1 // pred_fallthru
      _
    %371 = vsyncpa [#allocation3], 1

</llo_original>
